<compile_context>
chip_gen: v7x
topology: tpu7x:2x2x1
jax: 0.10.0
libtpu: 0.0.40
codegen_flags: <defaults>
</compile_context>

<pallas_src>
import math
import jax
import jax.numpy as jnp
from jax.experimental import pallas as pl
from jax.experimental.pallas import tpu as pltpu

_EPS = 1e-5
_LEAKY_SLOPE = 0.01


def _conv_in_lrelu_kernel(w_ref, p_ref, o_ref):
    # w_ref: (C_out, K)   p_ref: (K, P)   o_ref: (C_out, P)   with K = C_in*9, P = Ho*Wo
    w = w_ref[...].astype(jnp.float32)
    p = p_ref[...].astype(jnp.float32)
    y = jnp.dot(w, p, preferred_element_type=jnp.float32)          # MXU, f32 accumulate
    # InstanceNorm2d (no affine): per-channel mean/var over the flattened spatial axis.
    mean = jnp.mean(y, axis=1, keepdims=True)
    cent = y - mean
    var = jnp.mean(cent * cent, axis=1, keepdims=True)              # biased variance
    y = cent * jax.lax.rsqrt(var + _EPS)
    # LeakyReLU(negative_slope=0.01)
    y = jnp.where(y >= 0.0, y, _LEAKY_SLOPE * y)
    o_ref[...] = y.astype(o_ref.dtype)


def _im2col(x, k, stride, pad):
    """(N, C, H, W) -> (N, C*k*k, Ho*Wo). Pure layout work, left to XLA."""
    N, C, H, W = x.shape
    Ho = (H + 2 * pad - k) // stride + 1
    Wo = (W + 2 * pad - k) // stride + 1
    xp = jnp.pad(x, ((0, 0), (0, 0), (pad, pad), (pad, pad)))
    taps = []
    for kh in range(k):
        for kw in range(k):
            taps.append(xp[:, :, kh:kh + stride * (Ho - 1) + 1:stride,
                              kw:kw + stride * (Wo - 1) + 1:stride])
    cols = jnp.stack(taps, axis=2)                  # (N, C, k*k, Ho, Wo)
    return cols.reshape(N, C * k * k, Ho * Wo), Ho, Wo


def basic_conv_in(x, w, *, stride):
    """Conv2d(k=3, s=stride, p=1, bias=False) + InstanceNorm2d + LeakyReLU(0.01)."""
    N, C_in, H, W = x.shape
    C_out = w.shape[0]
    patches, Ho, Wo = _im2col(x, 3, stride, 1)      # (N, K, P)
    K = C_in * 9
    P = Ho * Wo
    w2d = w.reshape(C_out, K)

    out = pl.pallas_call(
        _conv_in_lrelu_kernel,
        out_shape=jax.ShapeDtypeStruct((N, C_out, P), x.dtype),
        grid=(N,),
        in_specs=[
            # weights: same full block every grid step (stays resident)
            pl.BlockSpec((C_out, K), lambda n: (0, 0)),
            # one batch element's patches per step; leading dim squeezed
            pl.BlockSpec((None, K, P), lambda n: (n, 0, 0)),
        ],
        out_specs=pl.BlockSpec((None, C_out, P), lambda n: (n, 0, 0)),
        compiler_params=pltpu.CompilerParams(dimension_semantics=("parallel",)),
    )(w2d, patches)
    return out.reshape(N, C_out, Ho, Wo)


def _nearest_resize(x, out_h, out_w):
    """F.interpolate(mode='nearest') equivalent: src = floor(dst * in / out)."""
    N, C, H, W = x.shape
    if (H, W) == (out_h, out_w):
        return x
    hi = (jnp.arange(out_h) * H) // out_h
    wi = (jnp.arange(out_w) * W) // out_w
    return x[:, :, hi[:, None], wi[None, :]]


def conv2x_in_forward(x, rem, w1, w2):
    """Forward of Conv2x_IN (2-D, deconv=False, concat=True, keep_concat=True)."""
    # TODO(synk): deconv=True (ConvTranspose2d/3d) and is_3d=True constructor variants
    # are not implemented; only the default 2-D stride-2 conv path is translated.
    y = basic_conv_in(x, w1, stride=2)
    y = _nearest_resize(y, rem.shape[-2], rem.shape[-1])
    y = jnp.concatenate([y, rem], axis=1)
    y = basic_conv_in(y, w2, stride=1)
    return y


# ----------------------------- pure-JAX reference -----------------------------
def _ref_basic(x, w, stride):
    y = jax.lax.conv_general_dilated(
        x, w, (stride, stride), ((1, 1), (1, 1)),
        dimension_numbers=("NCHW", "OIHW", "NCHW"),
        precision=jax.lax.Precision.HIGHEST)
    mean = jnp.mean(y, axis=(2, 3), keepdims=True)
    var = jnp.mean((y - mean) ** 2, axis=(2, 3), keepdims=True)
    y = (y - mean) * jax.lax.rsqrt(var + _EPS)
    return jnp.where(y >= 0.0, y, _LEAKY_SLOPE * y)


def _ref_forward(x, rem, w1, w2):
    y = _ref_basic(x, w1, 2)
    y = _nearest_resize(y, rem.shape[-2], rem.shape[-1])
    y = jnp.concatenate([y, rem], axis=1)
    return _ref_basic(y, w2, 1)


if __name__ == "__main__":
    N, in_ch, out_ch, H, W = 2, 8, 8, 16, 16

    key = jax.random.PRNGKey(0)
    k1, k2, k3, k4 = jax.random.split(key, 4)
    x = jax.random.normal(k1, (N, in_ch, H, W), dtype=jnp.float32)
    rem = jax.random.normal(k2, (N, out_ch, H // 2, W // 2), dtype=jnp.float32)
    w1 = jax.random.normal(k3, (out_ch, in_ch, 3, 3), dtype=jnp.float32) * (
        1.0 / math.sqrt(in_ch * 9))
    w2 = jax.random.normal(k4, (2 * out_ch, 2 * out_ch, 3, 3), dtype=jnp.float32) * (
        1.0 / math.sqrt(2 * out_ch * 9))

    out = conv2x_in_forward(x, rem, w1, w2)
    out = jax.block_until_ready(out)

    ref = _ref_forward(x, rem, w1, w2)
    assert out.shape == (N, 2 * out_ch, H // 2, W // 2), out.shape
    max_err = float(jnp.max(jnp.abs(out - ref)))
    assert jnp.allclose(out, ref, atol=2e-2, rtol=2e-2), f"mismatch vs reference, max_err={max_err}"

    print("KERNEL_OK")
</pallas_src>

<mosaic_0001>
module attributes {stable_mosaic.version = 11 : i64} {
  func.func @_conv_in_lrelu_kernel(%arg0: i32, %arg1: memref<8x72xf32, #tpu.memory_space<vmem>>, %arg2: memref<1x72x64xf32, #tpu.memory_space<vmem>>, %arg3: memref<1x8x64xf32, #tpu.memory_space<vmem>>) attributes {dimension_semantics = [#tpu.dimension_semantics<parallel>], iteration_bounds = array<i64: 2>, scalar_prefetch = 0 : i64, scratch_operands = 0 : i64, tpu.core_type = #tpu.core_type<tc>, window_params = [{pipeline_mode = #tpu.pipeline_mode<synchronous>, transform_indices = @transform_0, window_bounds = array<i64: 8, 72>}, {transform_indices = @transform_1, window_bounds = array<i64: 1, 72, 64>}, {transform_indices = @transform_2, window_bounds = array<i64: 1, 8, 64>}]} {
    %c0 = arith.constant 0 : index
    %c0_0 = arith.constant 0 : index
    %0 = vector.load %arg1[%c0, %c0_0] : memref<8x72xf32, #tpu.memory_space<vmem>>, vector<8x72xf32>
    %c0_1 = arith.constant 0 : index
    %c0_2 = arith.constant 0 : index
    %c0_3 = arith.constant 0 : index
    %1 = vector.load %arg2[%c0_1, %c0_2, %c0_3] : memref<1x72x64xf32, #tpu.memory_space<vmem>>, vector<1x72x64xf32>
    %2 = vector.shape_cast %1 : vector<1x72x64xf32> to vector<72x64xf32>
    %cst = arith.constant dense<0.000000e+00> : vector<8x64xf32>
    %3 = tpu.matmul %0, %2, %cst {dimension_numbers = #tpu.dot_dimension_numbers<[1], [0], [0], [1], [0, 0, 1, 1], [], []>} : vector<8x72xf32>, vector<72x64xf32>, vector<8x64xf32> -> vector<8x64xf32>
    %cst_4 = arith.constant dense<0.000000e+00> : vector<8xf32>
    %4 = vector.multi_reduction <add>, %3, %cst_4 [1] : vector<8x64xf32> to vector<8xf32>
    %5 = vector.shape_cast %4 : vector<8xf32> to vector<8x1xf32>
    %cst_5 = arith.constant 6.400000e+01 : f32
    %6 = vector.broadcast %cst_5 : f32 to vector<8x1xf32>
    %7 = arith.divf %5, %6 : vector<8x1xf32>
    %8 = vector.broadcast %7 : vector<8x1xf32> to vector<8x64xf32>
    %9 = arith.subf %3, %8 : vector<8x64xf32>
    %10 = arith.mulf %9, %9 : vector<8x64xf32>
    %cst_6 = arith.constant dense<0.000000e+00> : vector<8xf32>
    %11 = vector.multi_reduction <add>, %10, %cst_6 [1] : vector<8x64xf32> to vector<8xf32>
    %12 = vector.shape_cast %11 : vector<8xf32> to vector<8x1xf32>
    %cst_7 = arith.constant 6.400000e+01 : f32
    %13 = vector.broadcast %cst_7 : f32 to vector<8x1xf32>
    %14 = arith.divf %12, %13 : vector<8x1xf32>
    %cst_8 = arith.constant 9.99999974E-6 : f32
    %15 = vector.broadcast %cst_8 : f32 to vector<8x1xf32>
    %16 = arith.addf %14, %15 : vector<8x1xf32>
    %17 = math.rsqrt %16 : vector<8x1xf32>
    %18 = vector.broadcast %17 : vector<8x1xf32> to vector<8x64xf32>
    %19 = arith.mulf %9, %18 : vector<8x64xf32>
    %cst_9 = arith.constant 0.000000e+00 : f32
    %20 = vector.broadcast %cst_9 : f32 to vector<8x64xf32>
    %21 = arith.cmpf oge, %19, %20 : vector<8x64xf32>
    %cst_10 = arith.constant 0.00999999977 : f32
    %22 = vector.broadcast %cst_10 : f32 to vector<8x64xf32>
    %23 = arith.mulf %22, %19 : vector<8x64xf32>
    %24 = arith.select %21, %19, %23 : vector<8x64xi1>, vector<8x64xf32>
    %c0_11 = arith.constant 0 : index
    %c0_12 = arith.constant 0 : index
    %c0_13 = arith.constant 0 : index
    %25 = vector.load %arg3[%c0_11, %c0_12, %c0_13] : memref<1x8x64xf32, #tpu.memory_space<vmem>>, vector<1x8x64xf32>
    %26 = vector.shape_cast %25 : vector<1x8x64xf32> to vector<8x64xf32>
    %27 = vector.shape_cast %24 : vector<8x64xf32> to vector<1x8x64xf32>
    tpu.vector_store %arg3[%c0_11, %c0_12, %c0_13], %27 {strides = array<i32>} : memref<1x8x64xf32, #tpu.memory_space<vmem>>, vector<1x8x64xf32>,
    return
  }
  func.func @transform_0(%arg0: i32) -> (i32, i32) {
    %c0_i32 = arith.constant 0 : i32
    %c0_i32_0 = arith.constant 0 : i32
    %c0_i32_1 = arith.constant 0 : i32
    return %c0_i32, %c0_i32_0 : i32, i32
  }
  func.func @transform_1(%arg0: i32) -> (i32, i32, i32) {
    %c0_i32 = arith.constant 0 : i32
    %c0_i32_0 = arith.constant 0 : i32
    %c0_i32_1 = arith.constant 0 : i32
    return %arg0, %c0_i32, %c0_i32_0 : i32, i32, i32
  }
  func.func @transform_2(%arg0: i32) -> (i32, i32, i32) {
    %c0_i32 = arith.constant 0 : i32
    %c0_i32_0 = arith.constant 0 : i32
    %c0_i32_1 = arith.constant 0 : i32
    return %arg0, %c0_i32, %c0_i32_0 : i32, i32, i32
  }
}

</mosaic_0001>

<llo_original>
// kernel: tpu_custom_call.1
$region0: #{tpu_custom_call.1}
  #allocation0 [shape = 'u32[]', space=smem, size = 0x4, offset = 0x4, fixed_abs, tag = 'smem constant byte address 0x4 - core index']
  #allocation1 [shape = 'u32[144,128]{1,0:T(1,128)}', space=vmem, size = 0x12000, scoped, tag = 'internal scratch']
  %s0 = inlined_call_operand.vmem [shape: f32[8,72], index: 0, kind: input, shape index: {}]
  %s1 = inlined_call_operand.vmem [shape: f32[2,72,64], index: 1, kind: input, shape index: {}]
  %s2 = inlined_call_operand.hbm [shape: f32[2,8,64], index: 2, kind: output, shape index: {}]
  %s3 = sld [smem:[#allocation0]]
  $region41: #{tpu_custom_call.1} parent=0
    _
  %s5 = ssub.s32 1, %s3
  %s6 = scalar_select 0, %s5, %s3
  $region1: #{tpu_custom_call.1} parent=0
    #allocation2 [shape = 'u8[8192]{0}', space=vmem, size = 0x2000, scoped, tag = 'output window, operand 0']
    #allocation3 [shape = 's32[2]{0}', space=sflag, size = 0x8, scoped, tag = 'scoped memory for tpu_custom_call.1']
    %7 = vsyncpa [#allocation3], 0
    %s8 = scalar_lea.sflag [#allocation3], 1
    %9 = vsyncpa %s8, 0
    loop: start=0, step=1, limit=4
    $region2: #{tpu_custom_call.1} parent=1 // loop_pre_header
      _
    $region3: #{tpu_custom_call.1} parent=1 // loop_header
      %s11 = sphi 0, %s15
      %p12 = scmp.ge.s32.totalorder %s11, 4
      %s19 = sphi 0, %s19
      %s21 = sphi 0, %s19
      %s22 = sphi 0, %s21
      %s36 = sphi 0, %s22
      %s42 = sphi 0, %s44
      %s45 = sphi 0, %s42
      %s46 = sphi 0, %s45
      %s62 = sphi 0, %s46
      %s68 = sphi 0, %s70
      %s71 = sphi 0, %s68
      %s72 = sphi 0, %s71
      %s88 = sphi 0, %s72
    $region4: #{tpu_custom_call.1} parent=1 // loop_header_branch
      %14 = sbr.rel (%p12) target = $region8
    $region5: #{tpu_custom_call.1} parent=1 // loop_body
      %s16 = ssub.s32 %s11, 1
      %s17 = ssub.s32 %s11, 2
      %s18 = sadd.s32 %s11, 1
      %s20 = sadd.s32 %s19, 1
      %p23 = scmp.eq.s32.totalorder %s11, 1
      %p24 = scmp.ne.s32.totalorder %s19, %s21
      %p25 = scmp.eq.s32.totalorder %s11, 0
      %p26 = por %p24, %p25
      %p27 = scmp.ne.s32.totalorder %s19, %s21
      %p28 = scmp.eq.s32.totalorder %s16, 1
      %p29 = por %p27, %p28
      %p30 = scmp.ne.s32.totalorder %s21, %s22
      %p31 = scmp.eq.s32.totalorder %s16, 0
      %p32 = por %p30, %p31
      %p33 = scmp.ne.s32.totalorder %s21, %s22
      %p34 = scmp.eq.s32.totalorder %s17, 1
      %p35 = por %p33, %p34
      %p37 = scmp.ne.s32.totalorder %s22, %s36
      %p38 = scmp.eq.s32.totalorder %s17, 0
      %p39 = por %p37, %p38
      %s40 = ssub.s32 %s11, %s18
      %p41 = scmp.eq.s32.totalorder %s40, 0
      %s43 = sadd.s32 %s42, 1
      %s44 = scalar_select %p41, %s42, %s43
      %p47 = pneg %p41
      %p48 = scmp.eq.s32.totalorder %s11, 1
      %p49 = por %p47, %p48
      %p50 = scmp.ne.s32.totalorder %s42, %s45
      %p51 = scmp.eq.s32.totalorder %s11, 0
      %p52 = por %p50, %p51
      %p53 = scmp.ne.s32.totalorder %s42, %s45
      %p54 = scmp.eq.s32.totalorder %s16, 1
      %p55 = por %p53, %p54
      %p56 = scmp.ne.s32.totalorder %s45, %s46
      %p57 = scmp.eq.s32.totalorder %s16, 0
      %p58 = por %p56, %p57
      %p59 = scmp.ne.s32.totalorder %s45, %s46
      %p60 = scmp.eq.s32.totalorder %s17, 1
      %p61 = por %p59, %p60
      %p63 = scmp.ne.s32.totalorder %s46, %s62
      %p64 = scmp.eq.s32.totalorder %s17, 0
      %p65 = por %p63, %p64
      %s66 = ssub.s32 %s11, %s18
      %p67 = scmp.eq.s32.totalorder %s66, 0
      %s69 = sadd.s32 %s68, 1
      %s70 = scalar_select %p67, %s68, %s69
      %p73 = pneg %p67
      %p74 = scmp.eq.s32.totalorder %s11, 1
      %p75 = por %p73, %p74
      %p76 = scmp.ne.s32.totalorder %s68, %s71
      %p77 = scmp.eq.s32.totalorder %s11, 0
      %p78 = por %p76, %p77
      %p79 = scmp.ne.s32.totalorder %s68, %s71
      %p80 = scmp.eq.s32.totalorder %s16, 1
      %p81 = por %p79, %p80
      %p82 = scmp.ne.s32.totalorder %s71, %s72
      %p83 = scmp.eq.s32.totalorder %s16, 0
      %p84 = por %p82, %p83
      %p85 = scmp.ne.s32.totalorder %s71, %s72
      %p86 = scmp.eq.s32.totalorder %s17, 1
      %p87 = por %p85, %p86
      %p89 = scmp.ne.s32.totalorder %s72, %s88
      %p90 = scmp.eq.s32.totalorder %s17, 0
      %p91 = por %p89, %p90
      %p92 = scmp.le.s32.totalorder 1, %s11
      %p93 = scmp.lt.s32.totalorder %s11, 3
      %p94 = pnand %p92, %p93
      %p95 = pneg %p94
      // Predicated region
      $region9: #{tpu_custom_call.1} parent=5 // pred_check
        _
      $region10: #{tpu_custom_call.1} parent=5 // pred_check_branch
        %97 = sbr.rel (%p94) target = $region12
      $region11: #{tpu_custom_call.1} parent=5 // pred_region
        %s98 = ssub.s32 %s11, 1
        // Predicated region
        $region13: #{tpu_custom_call.1} parent=11 // pred_check
          %p99 = pneg %p32
        $region14: #{tpu_custom_call.1} parent=11 // pred_check_branch
          %101 = sbr.rel (%p99) target = $region16
        $region15: #{tpu_custom_call.1} parent=11 // pred_region
          _
        $region16: #{tpu_custom_call.1} parent=11 // pred_fallthru
          _
      $region12: #{tpu_custom_call.1} parent=5 // pred_fallthru
        _
      %p102 = scmp.lt.s32.totalorder %s11, 2
      // Predicated region
      $region17: #{tpu_custom_call.1} parent=5 // pred_check
        %p103 = pneg %p102
      $region18: #{tpu_custom_call.1} parent=5 // pred_check_branch
        %105 = sbr.rel (%p103) target = $region20
      $region19: #{tpu_custom_call.1} parent=5 // pred_region
        // Predicated region
        $region21: #{tpu_custom_call.1} parent=19 // pred_check
          %p106 = pneg %p52
        $region22: #{tpu_custom_call.1} parent=19 // pred_check_branch
          %108 = sbr.rel (%p106) target = $region24
        $region23: #{tpu_custom_call.1} parent=19 // pred_region
          %p109 = scmp.lt.s32.totalorder %s11, 1
          %s110 = scalar_select %p109, %s11, 1
          %s111 = smul.addr %s110, 9
          %s112 = smul.addr %s111, 8
          %s113 = scalar_lea.vmem %s1, %s112
        $region24: #{tpu_custom_call.1} parent=19 // pred_fallthru
          _
      $region20: #{tpu_custom_call.1} parent=5 // pred_fallthru
        _
      %p114 = scmp.le.s32.totalorder 1, %s11
      %p115 = scmp.lt.s32.totalorder %s11, 3
      %p116 = pnand %p114, %p115
      %p117 = pneg %p116
      // Predicated region
      $region25: #{tpu_custom_call.1} parent=5 // pred_check
        _
      $region26: #{tpu_custom_call.1} parent=5 // pred_check_branch
        %119 = sbr.rel (%p116) target = $region28
      $region27: #{tpu_custom_call.1} parent=5 // pred_region
        %s120 = ssub.s32 %s11, 1
        %p121 = pneg %p32
        %p122 = pneg %p29
        %p123 = scmp.lt.s32.totalorder %s16, 1
        %s124 = scalar_select %p123, %s16, 1
        %s125 = smul.addr %s124, 9
        %s126 = smul.addr %s125, 8
        %s127 = scalar_lea.vmem %s1, %s126
        %p128 = pneg %p58
        %p129 = pneg %p55
        %p130 = pneg %p84
        %p131 = pneg %p81
        %s132 = sand.u32 %s71, 1
        %s133 = scalar_lea.sflag [#allocation3], %s132
        %s134 = sand.u32 %s71, 1
        %s135 = smul.addr %s134, 8
        %s136 = scalar_lea.vmem [#allocation2], %s135
        %p137 = scmp.lt.s32.totalorder %s16, 1
        %s138 = scalar_select %p137, %s16, 1
        %s139 = smul.addr %s138, 9
        %s140 = smul.addr %s139, 8
        %s141 = scalar_lea.vmem %s1, %s140
        %v142 = vld [vmem:[%s0] sm:$0xff]
        %v143 = vld [vmem:[%s141] sm:$0xff]
        %v144 = vld [vmem:[%s141 + $0x8] sm:$0xff]
        %v145 = vld [vmem:[%s141 + $0x10] sm:$0xff]
        %v146 = vld [vmem:[%s141 + $0x18] sm:$0xff]
        %v147 = vld [vmem:[%s141 + $0x20] sm:$0xff]
        %v148 = vld [vmem:[%s141 + $0x28] sm:$0xff]
        %v149 = vld [vmem:[%s141 + $0x30] sm:$0xff]
        %v150 = vld [vmem:[%s141 + $0x38] sm:$0xff]
        %v151 = vld [vmem:[%s141 + $0x40] sm:$0xff]
        %vm152 = vcmask 588800
        %v154 = vsel %vm152, %v142, 0
        %156 = vmatprep.subr.mxu0 0.0
        %157 = vmatpush1.msra.mxu0 %v143
        %158 = vmatprep.subr.mxu0 0.0
        %159 = vmatpush1.msra.mxu0 %v144
        %160 = vmatprep.subr.mxu0 0.0
        %161 = vmatpush1.msra.mxu0 %v145
        %162 = vmatprep.subr.mxu0 0.0
        %163 = vmatpush1.msra.mxu0 %v146
        %164 = vmatprep.subr.mxu0 0.0
        %165 = vmatpush1.msra.mxu0 %v147
        %166 = vmatprep.subr.mxu0 0.0
        %167 = vmatpush1.msra.mxu0 %v148
        %168 = vmatprep.subr.mxu0 0.0
        %169 = vmatpush1.msra.mxu0 %v149
        %170 = vmatprep.subr.mxu0 0.0
        %171 = vmatpush1.msra.mxu0 %v150
        %172 = vmatprep.subr.mxu0 0.0
        %173 = vmatpush1.msra.mxu0 %v151
        %174 = vmatprep.subr.mxu0 0.0
        %175 = vmatpush1.msra.mxu0 0.0
        %176 = vmatprep.subr.mxu0 0.0
        %177 = vmatpush1.msra.mxu0 0.0
        %178 = vmatprep.subr.mxu0 0.0
        %179 = vmatpush1.msra.mxu0 0.0
        %180 = vmatprep.subr.mxu0 0.0
        %181 = vmatpush1.msra.mxu0 0.0
        %182 = vmatprep.subr.mxu0 0.0
        %183 = vmatpush1.msra.mxu0 0.0
        %184 = vmatprep.subr.mxu0 0.0
        %185 = vmatpush1.msra.mxu0 0.0
        %186 = vmatprep.subr.mxu0 0.0
        %187 = vmatpush1.msra.mxu0 0.0
        %188 = vmatprep.subr.mxu0 0.0
        %189 = vmatpush1.msra.mxu0 0.0
        %190 = vmatprep.subr.mxu0 0.0
        %191 = vmatpush1.msra.mxu0 0.0
        %192 = vmatprep.subr.mxu0 0.0
        %193 = vmatpush1.msra.mxu0 0.0
        %194 = vmatprep.subr.mxu0 0.0
        %195 = vmatpush1.msra.mxu0 0.0
        %196 = vmatprep.subr.mxu0 0.0
        %197 = vmatpush1.msra.mxu0 0.0
        %198 = vmatprep.subr.mxu0 0.0
        %199 = vmatpush1.msra.mxu0 0.0
        %200 = vmatprep.subr.mxu0 0.0
        %201 = vmatpush1.msra.mxu0 0.0
        %202 = vmatprep.subr.mxu0 0.0
        %203 = vmatpush1.msra.mxu0 0.0
        %204 = vmatprep.subr.mxu0 0.0
        %205 = vmatpush1.msra.mxu0 0.0
        %206 = vmatprep.subr.mxu0 0.0
        %207 = vmatpush1.msra.mxu0 0.0
        %208 = vmatprep.subr.mxu0 0.0
        %209 = vmatpush1.msra.mxu0 0.0
        %210 = vmatprep.subr.mxu0 0.0
        %211 = vmatpush1.msra.mxu0 0.0
        %212 = vmatprep.subr.mxu0 0.0
        %213 = vmatpush1.msra.mxu0 0.0
        %214 = vmatprep.subr.mxu0 0.0
        %215 = vmatpush1.msra.mxu0 0.0
        %216 = vmatprep.subr.mxu0 0.0
        %217 = vmatpush1.msra.mxu0 0.0
        %218 = vmatprep.subr.mxu0 0.0
        %219 = vmatpush1.msra.mxu0 0.0
        %220 = vmatprep.mubr.f32.mxu0 0.0
        %221 = vmatmul.mubr.f32.gmra.mrb[0].mxu0 %v154
        %v222 = vpop.f32.mrb[0].mxu0
        %v223 = vadd.f32 0.0, %v222
        %v224 = vpop.f32.mrb[0].mxu0
        %225 = vdwg.mxu0
        %vm226 = vcmask 523264
        %v227 = vsel %vm226, %v223, 0.0
        %228 = vadd.xlane.f32.xlu0 %v227
        %v229 = vpop.xlane.xlu0 %228
        %v230 = vrcp.pop 64.0
        %v231 = vmul.f32 %v229, %v230
        %v232 = vsub.f32 %v223, %v231
        %v233 = vmul.f32 %v232, %v232
        %v234 = vsel %vm226, %v233, 0.0
        %235 = vadd.xlane.f32.xlu0 %v234
        %v236 = vpop.xlane.xlu0 %235
        %v237 = vmul.f32 %v236, %v230
        %v238 = vadd.f32 %v237, 1e-05
        %v239 = vrsqrt.pop %v238
        %v240 = vmul.f32 %v232, %v239
        %vm241 = vcmp.ge.f32.partialorder %v240, 0.0
        %v242 = vmul.f32 %v240, 0.01
        %v243 = vsel %vm241, %v240, %v242
        %244 = vst.msk [vmem:[%s136] sm:$0xff] %vm226, %v243
        %s245 = sand.u32 %s71, 1
        %s246 = scalar_lea.sflag [#allocation3], %s245
        %s247 = sand.u32 %s71, 1
        %s248 = smul.addr %s247, 8
        %s249 = scalar_lea.vmem [#allocation2], %s248
        // Predicated region
        $region29: #{tpu_custom_call.1} parent=27 // pred_check
          %p250 = pneg %p81
        $region30: #{tpu_custom_call.1} parent=27 // pred_check_branch
          %252 = sbr.rel (%p250) target = $region32
        $region31: #{tpu_custom_call.1} parent=27 // pred_region
          %s254 = ssub.s32 128, 128
          %255 = vsyncadd %s246, %s254
          %s256 = smul.addr %s16, 128
          %s257 = scalar_lea.hbm %s2, %s256
          %s259 = sshll.u32 %s249, 4
          %s260 = int_to_ptr.vmem [resolvable:$true] %s259
          %262 = dma.vmem_to_hbm [thread:$0]  %s260, 128, %s257, %s246
        $region32: #{tpu_custom_call.1} parent=27 // pred_fallthru
          _
      $region28: #{tpu_custom_call.1} parent=5 // pred_fallthru
        _
      %p263 = scmp.le.s32.totalorder 2, %s11
      // Predicated region
      $region33: #{tpu_custom_call.1} parent=5 // pred_check
        %p264 = pneg %p263
      $region34: #{tpu_custom_call.1} parent=5 // pred_check_branch
        %266 = sbr.rel (%p264) target = $region36
      $region35: #{tpu_custom_call.1} parent=5 // pred_region
        %s267 = ssub.s32 %s11, 2
        // Predicated region
        $region37: #{tpu_custom_call.1} parent=35 // pred_check
          %p268 = pneg %p87
        $region38: #{tpu_custom_call.1} parent=35 // pred_check_branch
          %270 = sbr.rel (%p268) target = $region40
        $region39: #{tpu_custom_call.1} parent=35 // pred_region
          %s271 = sand.u32 %s72, 1
          %s272 = scalar_lea.sflag [#allocation3], %s271
          %s273 = sand.u32 %s72, 1
          %s274 = smul.addr %s273, 8
          %s275 = scalar_lea.vmem [#allocation2], %s274
          %276 = dma.done %s272, 128
        $region40: #{tpu_custom_call.1} parent=35 // pred_fallthru
          _
      $region36: #{tpu_custom_call.1} parent=5 // pred_fallthru
        _
    $region6: #{tpu_custom_call.1} parent=1 // loop_footer
      %s15 = sadd.s32 1, %s11
    $region7: #{tpu_custom_call.1} parent=1 // loop_footer_branch
      %10 = sbr.rel target = $region3
    $region8: #{tpu_custom_call.1} parent=1 // loop_exit
      _
    %277 = vsyncpa [#allocation3], 1
    %s278 = scalar_lea.sflag [#allocation3], 1
    %279 = vsyncpa %s278, 1

</llo_original>
